<compile_context>
chip_gen: v6e
topology: v6e:2x2x1
jax: 0.10.0
libtpu: 0.0.40
codegen_flags: <defaults>
</compile_context>

<pallas_src>
import functools

import jax
import jax.numpy as jnp
from jax.experimental import pallas as pl
from jax.experimental.pallas import tpu as pltpu

LANE = 512            # lane-dense last axis (multiple of 128)
NUM_SHARDS = 2        # parallel grid axis (uses both TCs on v7x; cheap no-op on v5e/v6e)
TARGET_TILE_R = 512   # (512, 512) f32 tile = 1 MiB/buffer; 4 inputs x 2 buffers = 8 MiB


def _round_up(x, m):
    return ((x + m - 1) // m) * m


def _loss_kernel(o_ref, t_ref, g_ref, t2_ref, part_ref, acc_ref, *, gradient_weight):
    """Accumulate (o-t)^2 + w*(g-t2)^2 into an (8, LANE) f32 accumulator per shard."""
    i = pl.program_id(1)

    @pl.when(i == 0)
    def _init():
        acc_ref[...] = jnp.zeros_like(acc_ref)

    # Upcast in-register (inputs arrive in native dtype; keep all math in f32 — v5e
    # has no bf16 VPU datapath).
    d1 = o_ref[...].astype(jnp.float32) - t_ref[...].astype(jnp.float32)
    d2 = g_ref[...].astype(jnp.float32) - t2_ref[...].astype(jnp.float32)
    contrib = d1 * d1 + jnp.float32(gradient_weight) * (d2 * d2)

    # Fold the (TILE_R, LANE) tile onto the (8, LANE) accumulator with pure vreg adds
    # (reshape keeps (8,128) tiles intact; sum over the leading axis is VPU-only).
    tile_r = contrib.shape[0]
    acc_ref[...] += contrib.reshape(tile_r // 8, 8, LANE).sum(axis=0)

    @pl.when(i == pl.num_programs(1) - 1)
    def _finalize():
        part_ref[...] = acc_ref[...].reshape(1, 8, LANE)


def _prepare(x, rows_padded):
    """Flatten to [rows_padded, LANE] in native dtype, zero-padding the tail."""
    flat = x.reshape(-1)
    pad = rows_padded * LANE - flat.shape[0]
    if pad:
        flat = jnp.pad(flat, (0, pad))
    return flat.reshape(rows_padded, LANE)


def custom_loss(outputs, targets, gradients, targets2, gradient_weight):
    """Pallas implementation of CustomLoss.forward given precomputed `gradients`."""
    assert outputs.shape == targets.shape, "outputs/targets shape mismatch"
    assert gradients.shape == targets2.shape, "gradients/targets2 shape mismatch"

    rows_o = pl.cdiv(int(outputs.size), LANE)
    rows_g = pl.cdiv(int(gradients.size), LANE)
    rows = max(rows_o, rows_g)

    tile_r = min(TARGET_TILE_R, _round_up(rows, 8))          # multiple of 8 sublanes
    rows_padded = _round_up(rows, NUM_SHARDS * tile_r)
    num_tiles = rows_padded // (NUM_SHARDS * tile_r)          # reduction steps per shard

    o = _prepare(outputs, rows_padded)
    t = _prepare(targets, rows_padded)
    g = _prepare(gradients, rows_padded)
    t2 = _prepare(targets2, rows_padded)

    row_map = lambda p, i: (p * num_tiles + i, 0)
    in_spec = pl.BlockSpec((tile_r, LANE), row_map)

    kernel = functools.partial(_loss_kernel, gradient_weight=float(gradient_weight))

    partials = pl.pallas_call(
        kernel,
        out_shape=jax.ShapeDtypeStruct((NUM_SHARDS, 8, LANE), jnp.float32),
        grid=(NUM_SHARDS, num_tiles),
        in_specs=[in_spec, in_spec, in_spec, in_spec],
        out_specs=pl.BlockSpec((1, 8, LANE), lambda p, i: (p, 0, 0)),
        scratch_shapes=[pltpu.VMEM((8, LANE), jnp.float32)],
        compiler_params=pltpu.CompilerParams(
            dimension_semantics=("parallel", "arbitrary"),
        ),
    )(o, t, g, t2)

    # Tiny final reduce (2 * 8 * 512 floats) + cross-shard add in the wrapper.
    return jnp.sum(partials)


def custom_loss_with_autograd(model_fn, inputs, targets, targets2, gradient_weight):
    """Full semantics of CustomLoss.forward:
    outputs = model_fn(inputs); gradients = VJP of outputs w.r.t. inputs with ones cotangent."""
    # TODO(synk): torch.autograd.grad has no Pallas equivalent; the VJP runs here in JAX,
    # the loss reductions run in the Pallas kernel.
    outputs, vjp_fn = jax.vjp(model_fn, inputs)
    (gradients,) = vjp_fn(jnp.ones_like(outputs))
    return custom_loss(outputs, targets, gradients, targets2, gradient_weight)


if __name__ == "__main__":
    key = jax.random.PRNGKey(0)
    k_in, k_t, k_t2 = jax.random.split(key, 3)

    # Small NCHW shapes consistent with a conv-style pipeline.
    N, C, H, W = 2, 4, 16, 16
    inputs = jax.random.normal(k_in, (N, C, H, W), dtype=jnp.float32)
    targets = jax.random.normal(k_t, (N, C, H, W), dtype=jnp.float32)
    targets2 = jax.random.normal(k_t2, (N, C, H, W), dtype=jnp.float32)
    gradient_weight = 0.5

    # Deterministic elementwise "model" producing outputs from inputs (stands in for the
    # upstream network whose graph PyTorch would differentiate through).
    def model_fn(x):
        return jnp.tanh(1.5 * x) + 0.25 * x * x

    loss = custom_loss_with_autograd(model_fn, inputs, targets, targets2, gradient_weight)
    loss = jax.block_until_ready(loss)

    # Pure-JAX reference for sanity.
    outputs_ref, vjp_fn = jax.vjp(model_fn, inputs)
    (grads_ref,) = vjp_fn(jnp.ones_like(outputs_ref))
    ref = jnp.sum((outputs_ref - targets) ** 2) + gradient_weight * jnp.sum(
        (grads_ref - targets2) ** 2
    )
    assert jnp.allclose(loss, ref, rtol=1e-5, atol=1e-4), (loss, ref)

    print("KERNEL_OK")
</pallas_src>

<mosaic_0001>
module attributes {stable_mosaic.version = 11 : i64} {
  func.func @_loss_kernel(%arg0: i32, %arg1: i32, %arg2: memref<8x512xf32, #tpu.memory_space<vmem>>, %arg3: memref<8x512xf32, #tpu.memory_space<vmem>>, %arg4: memref<8x512xf32, #tpu.memory_space<vmem>>, %arg5: memref<8x512xf32, #tpu.memory_space<vmem>>, %arg6: memref<1x8x512xf32, #tpu.memory_space<vmem>>, %arg7: memref<8x512xf32, #tpu.memory_space<vmem>>) attributes {dimension_semantics = [#tpu.dimension_semantics<parallel>, #tpu.dimension_semantics<arbitrary>], iteration_bounds = array<i64: 2, 1>, scalar_prefetch = 0 : i64, scratch_operands = 1 : i64, tpu.core_type = #tpu.core_type<tc>, window_params = [{transform_indices = @transform_0, window_bounds = array<i64: 8, 512>}, {transform_indices = @transform_1, window_bounds = array<i64: 8, 512>}, {transform_indices = @transform_2, window_bounds = array<i64: 8, 512>}, {transform_indices = @transform_3, window_bounds = array<i64: 8, 512>}, {transform_indices = @transform_4, window_bounds = array<i64: 1, 8, 512>}]} {
    %c0_i32 = arith.constant 0 : i32
    %0 = arith.cmpi eq, %arg1, %c0_i32 : i32
    %1 = arith.extui %0 : i1 to i32
    %c0_i32_0 = arith.constant 0 : i32
    %2 = arith.cmpi ne, %1, %c0_i32_0 : i32
    scf.if %2 {
      %cst_15 = arith.constant 0.000000e+00 : f32
      %22 = vector.broadcast %cst_15 : f32 to vector<8x512xf32>
      %c0_16 = arith.constant 0 : index
      %c0_17 = arith.constant 0 : index
      %23 = vector.load %arg7[%c0_16, %c0_17] : memref<8x512xf32, #tpu.memory_space<vmem>>, vector<8x512xf32>
      tpu.vector_store %arg7[%c0_16, %c0_17], %22 {strides = array<i32>} : memref<8x512xf32, #tpu.memory_space<vmem>>, vector<8x512xf32>,
    } else {
    }
    %c0 = arith.constant 0 : index
    %c0_1 = arith.constant 0 : index
    %3 = vector.load %arg2[%c0, %c0_1] : memref<8x512xf32, #tpu.memory_space<vmem>>, vector<8x512xf32>
    %c0_2 = arith.constant 0 : index
    %c0_3 = arith.constant 0 : index
    %4 = vector.load %arg3[%c0_2, %c0_3] : memref<8x512xf32, #tpu.memory_space<vmem>>, vector<8x512xf32>
    %5 = arith.subf %3, %4 : vector<8x512xf32>
    %c0_4 = arith.constant 0 : index
    %c0_5 = arith.constant 0 : index
    %6 = vector.load %arg4[%c0_4, %c0_5] : memref<8x512xf32, #tpu.memory_space<vmem>>, vector<8x512xf32>
    %c0_6 = arith.constant 0 : index
    %c0_7 = arith.constant 0 : index
    %7 = vector.load %arg5[%c0_6, %c0_7] : memref<8x512xf32, #tpu.memory_space<vmem>>, vector<8x512xf32>
    %8 = arith.subf %6, %7 : vector<8x512xf32>
    %9 = arith.mulf %5, %5 : vector<8x512xf32>
    %10 = arith.mulf %8, %8 : vector<8x512xf32>
    %cst = arith.constant 5.000000e-01 : f32
    %11 = vector.broadcast %cst : f32 to vector<8x512xf32>
    %12 = arith.mulf %11, %10 : vector<8x512xf32>
    %13 = arith.addf %9, %12 : vector<8x512xf32>
    %c0_8 = arith.constant 0 : index
    %c0_9 = arith.constant 0 : index
    %14 = vector.load %arg7[%c0_8, %c0_9] : memref<8x512xf32, #tpu.memory_space<vmem>>, vector<8x512xf32>
    %15 = vector.shape_cast %13 : vector<8x512xf32> to vector<1x8x512xf32>
    %cst_10 = arith.constant dense<0.000000e+00> : vector<8x512xf32>
    %16 = vector.multi_reduction <add>, %15, %cst_10 [0] : vector<1x8x512xf32> to vector<8x512xf32>
    %17 = arith.addf %14, %16 : vector<8x512xf32>
    %c0_11 = arith.constant 0 : index
    %c0_12 = arith.constant 0 : index
    %18 = vector.load %arg7[%c0_11, %c0_12] : memref<8x512xf32, #tpu.memory_space<vmem>>, vector<8x512xf32>
    tpu.vector_store %arg7[%c0_11, %c0_12], %17 {strides = array<i32>} : memref<8x512xf32, #tpu.memory_space<vmem>>, vector<8x512xf32>,
    %c0_i32_13 = arith.constant 0 : i32
    %19 = arith.cmpi eq, %arg1, %c0_i32_13 : i32
    %20 = arith.extui %19 : i1 to i32
    %c0_i32_14 = arith.constant 0 : i32
    %21 = arith.cmpi ne, %20, %c0_i32_14 : i32
    scf.if %21 {
      %c0_15 = arith.constant 0 : index
      %c0_16 = arith.constant 0 : index
      %22 = vector.load %arg7[%c0_15, %c0_16] : memref<8x512xf32, #tpu.memory_space<vmem>>, vector<8x512xf32>
      %23 = vector.shape_cast %22 : vector<8x512xf32> to vector<1x8x512xf32>
      %c0_17 = arith.constant 0 : index
      %c0_18 = arith.constant 0 : index
      %c0_19 = arith.constant 0 : index
      %24 = vector.load %arg6[%c0_17, %c0_18, %c0_19] : memref<1x8x512xf32, #tpu.memory_space<vmem>>, vector<1x8x512xf32>
      tpu.vector_store %arg6[%c0_17, %c0_18, %c0_19], %23 {strides = array<i32>} : memref<1x8x512xf32, #tpu.memory_space<vmem>>, vector<1x8x512xf32>,
    } else {
    }
    return
  }
  func.func @transform_0(%arg0: i32, %arg1: i32) -> (i32, i32) {
    %c1_i32 = arith.constant 1 : i32
    %0 = arith.muli %arg0, %c1_i32 : i32
    %1 = arith.addi %0, %arg1 : i32
    %c0_i32 = arith.constant 0 : i32
    %c0_i32_0 = arith.constant 0 : i32
    return %1, %c0_i32 : i32, i32
  }
  func.func @transform_1(%arg0: i32, %arg1: i32) -> (i32, i32) {
    %c1_i32 = arith.constant 1 : i32
    %0 = arith.muli %arg0, %c1_i32 : i32
    %1 = arith.addi %0, %arg1 : i32
    %c0_i32 = arith.constant 0 : i32
    %c0_i32_0 = arith.constant 0 : i32
    return %1, %c0_i32 : i32, i32
  }
  func.func @transform_2(%arg0: i32, %arg1: i32) -> (i32, i32) {
    %c1_i32 = arith.constant 1 : i32
    %0 = arith.muli %arg0, %c1_i32 : i32
    %1 = arith.addi %0, %arg1 : i32
    %c0_i32 = arith.constant 0 : i32
    %c0_i32_0 = arith.constant 0 : i32
    return %1, %c0_i32 : i32, i32
  }
  func.func @transform_3(%arg0: i32, %arg1: i32) -> (i32, i32) {
    %c1_i32 = arith.constant 1 : i32
    %0 = arith.muli %arg0, %c1_i32 : i32
    %1 = arith.addi %0, %arg1 : i32
    %c0_i32 = arith.constant 0 : i32
    %c0_i32_0 = arith.constant 0 : i32
    return %1, %c0_i32 : i32, i32
  }
  func.func @transform_4(%arg0: i32, %arg1: i32) -> (i32, i32, i32) {
    %c0_i32 = arith.constant 0 : i32
    %c0_i32_0 = arith.constant 0 : i32
    %c0_i32_1 = arith.constant 0 : i32
    return %arg0, %c0_i32, %c0_i32_0 : i32, i32, i32
  }
}

</mosaic_0001>

<llo_original>
// kernel: tpu_custom_call.1
$region0: #{tpu_custom_call.1}
  #allocation0 [shape = 'u32[]', space=smem, size = 0x4, offset = 0x4, fixed_abs, tag = 'smem constant byte address 0x4 - core index']
  #allocation1 [shape = 'u32[144,128]{1,0:T(1,128)}', space=vmem, size = 0x12000, scoped, tag = 'internal scratch']
  #allocation2 [shape = 'f32[8,512]{1,0:T(8,128)}', space=vmem, size = 0x4000, scoped, tag = 'scratch operand']
  %s0 = inlined_call_operand.hbm [shape: f32[16,512], index: 0, kind: input, shape index: {}]
  %s1 = inlined_call_operand.hbm [shape: f32[16,512], index: 1, kind: input, shape index: {}]
  %s2 = inlined_call_operand.hbm [shape: f32[16,512], index: 2, kind: input, shape index: {}]
  %s3 = inlined_call_operand.hbm [shape: f32[16,512], index: 3, kind: input, shape index: {}]
  %s4 = inlined_call_operand.hbm [shape: f32[2,8,512], index: 4, kind: output, shape index: {}]
  %s5 = sld [smem:[#allocation0]]
  $region73: #{tpu_custom_call.1} parent=0
    _
  %s7 = ssub.s32 1, %s5
  %s8 = scalar_select 0, %s7, %s5
  $region1: #{tpu_custom_call.1} parent=0
    #allocation3 [shape = 'u8[32768]{0}', space=vmem, size = 0x8000, scoped, tag = 'input window, operand 0']
    #allocation4 [shape = 's32[2]{0}', space=sflag, size = 0x8, scoped, tag = 'scoped memory for tpu_custom_call.1']
    #allocation5 [shape = 's32[2]{0}', space=sflag, size = 0x8, scoped, tag = 'scoped memory for tpu_custom_call.1']
    #allocation6 [shape = 'u8[32768]{0}', space=vmem, size = 0x8000, scoped, tag = 'input window, operand 1']
    #allocation7 [shape = 's32[2]{0}', space=sflag, size = 0x8, scoped, tag = 'scoped memory for tpu_custom_call.1']
    #allocation8 [shape = 'u8[32768]{0}', space=vmem, size = 0x8000, scoped, tag = 'input window, operand 2']
    #allocation9 [shape = 'u8[32768]{0}', space=vmem, size = 0x8000, scoped, tag = 'input window, operand 3']
    #allocation10 [shape = 's32[2]{0}', space=sflag, size = 0x8, scoped, tag = 'scoped memory for tpu_custom_call.1']
    #allocation11 [shape = 'u8[32768]{0}', space=vmem, size = 0x8000, scoped, tag = 'output window, operand 0']
    %9 = vsyncpa [#allocation4], 0
    %s10 = scalar_lea.sflag [#allocation4], 1
    %11 = vsyncpa %s10, 0
    %12 = vsyncpa [#allocation7], 0
    %s13 = scalar_lea.sflag [#allocation7], 1
    %14 = vsyncpa %s13, 0
    %15 = vsyncpa [#allocation10], 0
    %s16 = scalar_lea.sflag [#allocation10], 1
    %17 = vsyncpa %s16, 0
    %18 = vsyncpa [#allocation5], 0
    %s19 = scalar_lea.sflag [#allocation5], 1
    %20 = vsyncpa %s19, 0
    loop: start=0, step=1, limit=4
    $region2: #{tpu_custom_call.1} parent=1 // loop_pre_header
      _
    $region3: #{tpu_custom_call.1} parent=1 // loop_header
      %s22 = sphi 0, %s26
      %p23 = scmp.ge.s32.totalorder %s22, 4
      %s29 = sphi 0, %s41
      %s30 = sphi 0, %s37
      %s31 = sphi 0, %s29
      %s32 = sphi 0, %s30
      %s33 = sphi 0, %s31
      %s34 = sphi 0, %s32
      %s46 = sphi 0, %s48
      %s49 = sphi 0, %s46
      %s50 = sphi 0, %s49
      %s66 = sphi 0, %s50
      %s74 = sphi 0, %s76
      %s77 = sphi 0, %s74
      %s78 = sphi 0, %s77
      %s94 = sphi 0, %s78
      %s102 = sphi 0, %s104
      %s105 = sphi 0, %s102
      %s106 = sphi 0, %s105
      %s122 = sphi 0, %s106
      %s130 = sphi 0, %s132
      %s133 = sphi 0, %s130
      %s134 = sphi 0, %s133
      %s150 = sphi 0, %s134
      %s156 = sphi 0, %s158
      %s159 = sphi 0, %s156
      %s160 = sphi 0, %s159
      %s176 = sphi 0, %s160
    $region4: #{tpu_custom_call.1} parent=1 // loop_header_branch
      %25 = sbr.rel (%p23) target = $region8
    $region5: #{tpu_custom_call.1} parent=1 // loop_body
      %s27 = ssub.s32 %s22, 1
      %s28 = ssub.s32 %s22, 2
      %s35 = sadd.s32 1, %s30
      %p36 = scmp.ge.s32.totalorder %s35, 1
      %s37 = scalar_select %p36, 0, %s35
      %s38 = sadd.s32 1, %s29
      %s39 = scalar_select %p36, %s38, %s29
      %p40 = scmp.ge.s32.totalorder %s39, 2
      %s41 = scalar_select %p40, 0, %s39
      %s42 = sadd.s32 %s29, %s30
      %s43 = sadd.s32 %s41, %s37
      %s44 = ssub.s32 %s42, %s43
      %p45 = scmp.eq.s32.totalorder %s44, 0
      %s47 = sadd.s32 %s46, 1
      %s48 = scalar_select %p45, %s46, %s47
      %p51 = pneg %p45
      %p52 = scmp.eq.s32.totalorder %s22, 1
      %p53 = por %p51, %p52
      %p54 = scmp.ne.s32.totalorder %s46, %s49
      %p55 = scmp.eq.s32.totalorder %s22, 0
      %p56 = por %p54, %p55
      %p57 = scmp.ne.s32.totalorder %s46, %s49
      %p58 = scmp.eq.s32.totalorder %s27, 1
      %p59 = por %p57, %p58
      %p60 = scmp.ne.s32.totalorder %s49, %s50
      %p61 = scmp.eq.s32.totalorder %s27, 0
      %p62 = por %p60, %p61
      %p63 = scmp.ne.s32.totalorder %s49, %s50
      %p64 = scmp.eq.s32.totalorder %s28, 1
      %p65 = por %p63, %p64
      %p67 = scmp.ne.s32.totalorder %s50, %s66
      %p68 = scmp.eq.s32.totalorder %s28, 0
      %p69 = por %p67, %p68
      %s70 = sadd.s32 %s29, %s30
      %s71 = sadd.s32 %s41, %s37
      %s72 = ssub.s32 %s70, %s71
      %p73 = scmp.eq.s32.totalorder %s72, 0
      %s75 = sadd.s32 %s74, 1
      %s76 = scalar_select %p73, %s74, %s75
      %p79 = pneg %p73
      %p80 = scmp.eq.s32.totalorder %s22, 1
      %p81 = por %p79, %p80
      %p82 = scmp.ne.s32.totalorder %s74, %s77
      %p83 = scmp.eq.s32.totalorder %s22, 0
      %p84 = por %p82, %p83
      %p85 = scmp.ne.s32.totalorder %s74, %s77
      %p86 = scmp.eq.s32.totalorder %s27, 1
      %p87 = por %p85, %p86
      %p88 = scmp.ne.s32.totalorder %s77, %s78
      %p89 = scmp.eq.s32.totalorder %s27, 0
      %p90 = por %p88, %p89
      %p91 = scmp.ne.s32.totalorder %s77, %s78
      %p92 = scmp.eq.s32.totalorder %s28, 1
      %p93 = por %p91, %p92
      %p95 = scmp.ne.s32.totalorder %s78, %s94
      %p96 = scmp.eq.s32.totalorder %s28, 0
      %p97 = por %p95, %p96
      %s98 = sadd.s32 %s29, %s30
      %s99 = sadd.s32 %s41, %s37
      %s100 = ssub.s32 %s98, %s99
      %p101 = scmp.eq.s32.totalorder %s100, 0
      %s103 = sadd.s32 %s102, 1
      %s104 = scalar_select %p101, %s102, %s103
      %p107 = pneg %p101
      %p108 = scmp.eq.s32.totalorder %s22, 1
      %p109 = por %p107, %p108
      %p110 = scmp.ne.s32.totalorder %s102, %s105
      %p111 = scmp.eq.s32.totalorder %s22, 0
      %p112 = por %p110, %p111
      %p113 = scmp.ne.s32.totalorder %s102, %s105
      %p114 = scmp.eq.s32.totalorder %s27, 1
      %p115 = por %p113, %p114
      %p116 = scmp.ne.s32.totalorder %s105, %s106
      %p117 = scmp.eq.s32.totalorder %s27, 0
      %p118 = por %p116, %p117
      %p119 = scmp.ne.s32.totalorder %s105, %s106
      %p120 = scmp.eq.s32.totalorder %s28, 1
      %p121 = por %p119, %p120
      %p123 = scmp.ne.s32.totalorder %s106, %s122
      %p124 = scmp.eq.s32.totalorder %s28, 0
      %p125 = por %p123, %p124
      %s126 = sadd.s32 %s29, %s30
      %s127 = sadd.s32 %s41, %s37
      %s128 = ssub.s32 %s126, %s127
      %p129 = scmp.eq.s32.totalorder %s128, 0
      %s131 = sadd.s32 %s130, 1
      %s132 = scalar_select %p129, %s130, %s131
      %p135 = pneg %p129
      %p136 = scmp.eq.s32.totalorder %s22, 1
      %p137 = por %p135, %p136
      %p138 = scmp.ne.s32.totalorder %s130, %s133
      %p139 = scmp.eq.s32.totalorder %s22, 0
      %p140 = por %p138, %p139
      %p141 = scmp.ne.s32.totalorder %s130, %s133
      %p142 = scmp.eq.s32.totalorder %s27, 1
      %p143 = por %p141, %p142
      %p144 = scmp.ne.s32.totalorder %s133, %s134
      %p145 = scmp.eq.s32.totalorder %s27, 0
      %p146 = por %p144, %p145
      %p147 = scmp.ne.s32.totalorder %s133, %s134
      %p148 = scmp.eq.s32.totalorder %s28, 1
      %p149 = por %p147, %p148
      %p151 = scmp.ne.s32.totalorder %s134, %s150
      %p152 = scmp.eq.s32.totalorder %s28, 0
      %p153 = por %p151, %p152
      %s154 = ssub.s32 %s29, %s41
      %p155 = scmp.eq.s32.totalorder %s154, 0
      %s157 = sadd.s32 %s156, 1
      %s158 = scalar_select %p155, %s156, %s157
      %p161 = pneg %p155
      %p162 = scmp.eq.s32.totalorder %s22, 1
      %p163 = por %p161, %p162
      %p164 = scmp.ne.s32.totalorder %s156, %s159
      %p165 = scmp.eq.s32.totalorder %s22, 0
      %p166 = por %p164, %p165
      %p167 = scmp.ne.s32.totalorder %s156, %s159
      %p168 = scmp.eq.s32.totalorder %s27, 1
      %p169 = por %p167, %p168
      %p170 = scmp.ne.s32.totalorder %s159, %s160
      %p171 = scmp.eq.s32.totalorder %s27, 0
      %p172 = por %p170, %p171
      %p173 = scmp.ne.s32.totalorder %s159, %s160
      %p174 = scmp.eq.s32.totalorder %s28, 1
      %p175 = por %p173, %p174
      %p177 = scmp.ne.s32.totalorder %s160, %s176
      %p178 = scmp.eq.s32.totalorder %s28, 0
      %p179 = por %p177, %p178
      %p180 = scmp.le.s32.totalorder 1, %s22
      %p181 = scmp.lt.s32.totalorder %s22, 3
      %p182 = pnand %p180, %p181
      %p183 = pneg %p182
      // Predicated region
      $region9: #{tpu_custom_call.1} parent=5 // pred_check
        _
      $region10: #{tpu_custom_call.1} parent=5 // pred_check_branch
        %185 = sbr.rel (%p182) target = $region12
      $region11: #{tpu_custom_call.1} parent=5 // pred_region
        %s186 = ssub.s32 %s22, 1
      $region12: #{tpu_custom_call.1} parent=5 // pred_fallthru
        _
      %p187 = scmp.lt.s32.totalorder %s22, 2
      // Predicated region
      $region13: #{tpu_custom_call.1} parent=5 // pred_check
        %p188 = pneg %p187
      $region14: #{tpu_custom_call.1} parent=5 // pred_check_branch
        %190 = sbr.rel (%p188) target = $region16
      $region15: #{tpu_custom_call.1} parent=5 // pred_region
        // Predicated region
        $region17: #{tpu_custom_call.1} parent=15 // pred_check
          %p191 = pneg %p56
        $region18: #{tpu_custom_call.1} parent=15 // pred_check_branch
          %193 = sbr.rel (%p191) target = $region20
        $region19: #{tpu_custom_call.1} parent=15 // pred_region
          %s194 = sand.u32 %s46, 1
          %s195 = scalar_lea.sflag [#allocation4], %s194
          %s196 = sand.u32 %s46, 1
          %s197 = smul.addr %s196, 32
          %s198 = scalar_lea.vmem [#allocation3], %s197
          %s199 = sadd.s32 %s29, %s30
          %s201 = ssub.s32 512, 512
          %202 = vsyncadd %s195, %s201
          %s203 = smul.addr %s199, 4
          %s204 = smul.addr %s203, 128
          %s205 = scalar_lea.hbm %s0, %s204
          %s207 = sshll.u32 %s198, 4
          %s208 = int_to_ptr.vmem [resolvable:$true] %s207
          %210 = dma.hbm_to_vmem [thread:$0]  %s205, 512, %s208, %s195
        $region20: #{tpu_custom_call.1} parent=15 // pred_fallthru
          _
        // Predicated region
        $region21: #{tpu_custom_call.1} parent=15 // pred_check
          %p211 = pneg %p84
        $region22: #{tpu_custom_call.1} parent=15 // pred_check_branch
          %213 = sbr.rel (%p211) target = $region24
        $region23: #{tpu_custom_call.1} parent=15 // pred_region
          %s214 = sand.u32 %s22, 1
          %s215 = scalar_lea.sflag [#allocation7], %s214
          %s216 = sand.u32 %s74, 1
          %s217 = smul.addr %s216, 32
          %s218 = scalar_lea.vmem [#allocation6], %s217
          %s219 = sadd.s32 %s29, %s30
          %s221 = ssub.s32 512, 512
          %222 = vsyncadd %s215, %s221
          %s223 = smul.addr %s219, 4
          %s224 = smul.addr %s223, 128
          %s225 = scalar_lea.hbm %s1, %s224
          %s227 = sshll.u32 %s218, 4
          %s228 = int_to_ptr.vmem [resolvable:$true] %s227
          %230 = dma.hbm_to_vmem [thread:$0]  %s225, 512, %s228, %s215
        $region24: #{tpu_custom_call.1} parent=15 // pred_fallthru
          _
        // Predicated region
        $region25: #{tpu_custom_call.1} parent=15 // pred_check
          %p231 = pneg %p112
        $region26: #{tpu_custom_call.1} parent=15 // pred_check_branch
          %233 = sbr.rel (%p231) target = $region28
        $region27: #{tpu_custom_call.1} parent=15 // pred_region
          %s234 = sand.u32 %s22, 1
          %s235 = scalar_lea.sflag [#allocation7], %s234
          %s236 = sand.u32 %s102, 1
          %s237 = smul.addr %s236, 32
          %s238 = scalar_lea.vmem [#allocation8], %s237
          %s239 = sadd.s32 %s29, %s30
          %s241 = ssub.s32 512, 512
          %242 = vsyncadd %s235, %s241
          %s243 = smul.addr %s239, 4
          %s244 = smul.addr %s243, 128
          %s245 = scalar_lea.hbm %s2, %s244
          %s247 = sshll.u32 %s238, 4
          %s248 = int_to_ptr.vmem [resolvable:$true] %s247
          %250 = dma.hbm_to_vmem [thread:$0]  %s245, 512, %s248, %s235
        $region28: #{tpu_custom_call.1} parent=15 // pred_fallthru
          _
        // Predicated region
        $region29: #{tpu_custom_call.1} parent=15 // pred_check
          %p251 = pneg %p140
        $region30: #{tpu_custom_call.1} parent=15 // pred_check_branch
          %253 = sbr.rel (%p251) target = $region32
        $region31: #{tpu_custom_call.1} parent=15 // pred_region
          %s254 = sand.u32 %s130, 1
          %s255 = scalar_lea.sflag [#allocation10], %s254
          %s256 = sand.u32 %s130, 1
          %s257 = smul.addr %s256, 32
          %s258 = scalar_lea.vmem [#allocation9], %s257
          %s259 = sadd.s32 %s29, %s30
          %s261 = ssub.s32 512, 512
          %262 = vsyncadd %s255, %s261
          %s263 = smul.addr %s259, 4
          %s264 = smul.addr %s263, 128
          %s265 = scalar_lea.hbm %s3, %s264
          %s267 = sshll.u32 %s258, 4
          %s268 = int_to_ptr.vmem [resolvable:$true] %s267
          %270 = dma.hbm_to_vmem [thread:$0]  %s265, 512, %s268, %s255
        $region32: #{tpu_custom_call.1} parent=15 // pred_fallthru
          _
      $region16: #{tpu_custom_call.1} parent=5 // pred_fallthru
        _
      %p271 = scmp.le.s32.totalorder 1, %s22
      %p272 = scmp.lt.s32.totalorder %s22, 3
      %p273 = pnand %p271, %p272
      %p274 = pneg %p273
      // Predicated region
      $region33: #{tpu_custom_call.1} parent=5 // pred_check
        _
      $region34: #{tpu_custom_call.1} parent=5 // pred_check_branch
        %276 = sbr.rel (%p273) target = $region36
      $region35: #{tpu_custom_call.1} parent=5 // pred_region
        %s277 = ssub.s32 %s22, 1
        %s278 = sand.u32 %s49, 1
        %s279 = scalar_lea.sflag [#allocation4], %s278
        %s280 = sand.u32 %s49, 1
        %s281 = smul.addr %s280, 32
        %s282 = scalar_lea.vmem [#allocation3], %s281
        // Predicated region
        $region37: #{tpu_custom_call.1} parent=35 // pred_check
          %p283 = pneg %p62
        $region38: #{tpu_custom_call.1} parent=35 // pred_check_branch
          %285 = sbr.rel (%p283) target = $region40
        $region39: #{tpu_custom_call.1} parent=35 // pred_region
          %286 = dma.done %s279, 512
        $region40: #{tpu_custom_call.1} parent=35 // pred_fallthru
          _
        %s287 = sand.u32 %s27, 1
        %s288 = scalar_lea.sflag [#allocation7], %s287
        %s289 = sand.u32 %s77, 1
        %s290 = smul.addr %s289, 32
        %s291 = scalar_lea.vmem [#allocation6], %s290
        // Predicated region
        $region41: #{tpu_custom_call.1} parent=35 // pred_check
          %p292 = pneg %p90
        $region42: #{tpu_custom_call.1} parent=35 // pred_check_branch
          %294 = sbr.rel (%p292) target = $region44
        $region43: #{tpu_custom_call.1} parent=35 // pred_region
          %295 = dma.done %s288, 512
        $region44: #{tpu_custom_call.1} parent=35 // pred_fallthru
          _
        %s296 = sand.u32 %s27, 1
        %s297 = scalar_lea.sflag [#allocation7], %s296
        %s298 = sand.u32 %s105, 1
        %s299 = smul.addr %s298, 32
        %s300 = scalar_lea.vmem [#allocation8], %s299
        // Predicated region
        $region45: #{tpu_custom_call.1} parent=35 // pred_check
          %p301 = pneg %p118
        $region46: #{tpu_custom_call.1} parent=35 // pred_check_branch
          %303 = sbr.rel (%p301) target = $region48
        $region47: #{tpu_custom_call.1} parent=35 // pred_region
          %304 = dma.done %s297, 512
        $region48: #{tpu_custom_call.1} parent=35 // pred_fallthru
          _
        %s305 = sand.u32 %s133, 1
        %s306 = scalar_lea.sflag [#allocation10], %s305
        %s307 = sand.u32 %s133, 1
        %s308 = smul.addr %s307, 32
        %s309 = scalar_lea.vmem [#allocation9], %s308
        // Predicated region
        $region49: #{tpu_custom_call.1} parent=35 // pred_check
          %p310 = pneg %p146
        $region50: #{tpu_custom_call.1} parent=35 // pred_check_branch
          %312 = sbr.rel (%p310) target = $region52
        $region51: #{tpu_custom_call.1} parent=35 // pred_region
          %313 = dma.done %s306, 512
        $region52: #{tpu_custom_call.1} parent=35 // pred_fallthru
          _
        %s314 = sand.u32 %s49, 1
        %s315 = scalar_lea.sflag [#allocation4], %s314
        %s316 = sand.u32 %s49, 1
        %s317 = smul.addr %s316, 32
        %s318 = scalar_lea.vmem [#allocation3], %s317
        %p319 = pneg %p62
        %p320 = pneg %p59
        %s321 = sand.u32 %s27, 1
        %s322 = scalar_lea.sflag [#allocation7], %s321
        %s323 = sand.u32 %s77, 1
        %s324 = smul.addr %s323, 32
        %s325 = scalar_lea.vmem [#allocation6], %s324
        %p326 = pneg %p90
        %p327 = pneg %p87
        %s328 = sand.u32 %s27, 1
        %s329 = scalar_lea.sflag [#allocation7], %s328
        %s330 = sand.u32 %s105, 1
        %s331 = smul.addr %s330, 32
        %s332 = scalar_lea.vmem [#allocation8], %s331
        %p333 = pneg %p118
        %p334 = pneg %p115
        %s335 = sand.u32 %s133, 1
        %s336 = scalar_lea.sflag [#allocation10], %s335
        %s337 = sand.u32 %s133, 1
        %s338 = smul.addr %s337, 32
        %s339 = scalar_lea.vmem [#allocation9], %s338
        %p340 = pneg %p146
        %p341 = pneg %p143
        %p342 = pneg %p172
        %p343 = pneg %p169
        %s344 = sand.u32 %s159, 1
        %s345 = scalar_lea.sflag [#allocation5], %s344
        %s346 = sand.u32 %s159, 1
        %s347 = smul.addr %s346, 32
        %s348 = scalar_lea.vmem [#allocation11], %s347
        %s349 = sadd.s32 %s31, %s32
        %s350 = sadd.s32 %s31, %s32
        %s351 = sadd.s32 %s31, %s32
        %s352 = sadd.s32 %s31, %s32
        %p353 = scmp.eq.s32.totalorder %s32, 0
        // Predicated region
        $region53: #{tpu_custom_call.1} parent=35 // pred_check
          %p354 = pneg %p353
        $region54: #{tpu_custom_call.1} parent=35 // pred_check_branch
          %356 = sbr.rel (%p354) target = $region56
        $region55: #{tpu_custom_call.1} parent=35 // pred_region
          %357 = vst [vmem:[#allocation2] sm:$0xff] 0.0
          %358 = vst [vmem:[#allocation2 + $0x8] sm:$0xff] 0.0
          %359 = vst [vmem:[#allocation2 + $0x10] sm:$0xff] 0.0
          %360 = vst [vmem:[#allocation2 + $0x18] sm:$0xff] 0.0
        $region56: #{tpu_custom_call.1} parent=35 // pred_fallthru
          _
        %v361 = vld [vmem:[%s282] sm:$0xff]
        %v362 = vld [vmem:[%s282 + $0x8] sm:$0xff]
        %v363 = vld [vmem:[%s282 + $0x10] sm:$0xff]
        %v364 = vld [vmem:[%s282 + $0x18] sm:$0xff]
        %v365 = vld [vmem:[%s291] sm:$0xff]
        %v366 = vld [vmem:[%s291 + $0x8] sm:$0xff]
        %v367 = vld [vmem:[%s291 + $0x10] sm:$0xff]
        %v368 = vld [vmem:[%s291 + $0x18] sm:$0xff]
        %v369 = vsub.f32 %v361, %v365
        %v370 = vsub.f32 %v362, %v366
        %v371 = vsub.f32 %v363, %v367
        %v372 = vsub.f32 %v364, %v368
        %v373 = vld [vmem:[%s300] sm:$0xff]
        %v374 = vld [vmem:[%s300 + $0x8] sm:$0xff]
        %v375 = vld [vmem:[%s300 + $0x10] sm:$0xff]
        %v376 = vld [vmem:[%s300 + $0x18] sm:$0xff]
        %v377 = vld [vmem:[%s309] sm:$0xff]
        %v378 = vld [vmem:[%s309 + $0x8] sm:$0xff]
        %v379 = vld [vmem:[%s309 + $0x10] sm:$0xff]
        %v380 = vld [vmem:[%s309 + $0x18] sm:$0xff]
        %v381 = vsub.f32 %v373, %v377
        %v382 = vsub.f32 %v374, %v378
        %v383 = vsub.f32 %v375, %v379
        %v384 = vsub.f32 %v376, %v380
        %v385 = vmul.f32 %v369, %v369
        %v386 = vmul.f32 %v370, %v370
        %v387 = vmul.f32 %v371, %v371
        %v388 = vmul.f32 %v372, %v372
        %v389 = vmul.f32 %v381, %v381
        %v390 = vmul.f32 %v382, %v382
        %v391 = vmul.f32 %v383, %v383
        %v392 = vmul.f32 %v384, %v384
        %v393 = vmul.f32 %v389, 0.5
        %v394 = vmul.f32 %v390, 0.5
        %v395 = vmul.f32 %v391, 0.5
        %v396 = vmul.f32 %v392, 0.5
        %v397 = vadd.f32 %v385, %v393
        %v398 = vadd.f32 %v386, %v394
        %v399 = vadd.f32 %v387, %v395
        %v400 = vadd.f32 %v388, %v396
        %v401 = vld [vmem:[#allocation2] sm:$0xff]
        %v402 = vld [vmem:[#allocation2 + $0x8] sm:$0xff]
        %v403 = vld [vmem:[#allocation2 + $0x10] sm:$0xff]
        %v404 = vld [vmem:[#allocation2 + $0x18] sm:$0xff]
        %v405 = vadd.f32 %v397, 0.0
        %v406 = vadd.f32 %v398, 0.0
        %v407 = vadd.f32 %v399, 0.0
        %v408 = vadd.f32 %v400, 0.0
        %v409 = vadd.f32 %v401, %v405
        %v410 = vadd.f32 %v402, %v406
        %v411 = vadd.f32 %v403, %v407
        %v412 = vadd.f32 %v404, %v408
        %413 = vst [vmem:[#allocation2] sm:$0xff] %v409
        %414 = vst [vmem:[#allocation2 + $0x8] sm:$0xff] %v410
        %415 = vst [vmem:[#allocation2 + $0x10] sm:$0xff] %v411
        %416 = vst [vmem:[#allocation2 + $0x18] sm:$0xff] %v412
        // Predicated region
        $region57: #{tpu_custom_call.1} parent=35 // pred_check
          %p417 = pneg %p353
        $region58: #{tpu_custom_call.1} parent=35 // pred_check_branch
          %419 = sbr.rel (%p417) target = $region60
        $region59: #{tpu_custom_call.1} parent=35 // pred_region
          %v420 = vld [vmem:[#allocation2] sm:$0xff]
          %v421 = vld [vmem:[#allocation2 + $0x8] sm:$0xff]
          %v422 = vld [vmem:[#allocation2 + $0x10] sm:$0xff]
          %v423 = vld [vmem:[#allocation2 + $0x18] sm:$0xff]
          %424 = vst [vmem:[%s348] sm:$0xff] %v420
          %425 = vst [vmem:[%s348 + $0x8] sm:$0xff] %v421
          %426 = vst [vmem:[%s348 + $0x10] sm:$0xff] %v422
          %427 = vst [vmem:[%s348 + $0x18] sm:$0xff] %v423
        $region60: #{tpu_custom_call.1} parent=35 // pred_fallthru
          _
        %s428 = sand.u32 %s159, 1
        %s429 = scalar_lea.sflag [#allocation5], %s428
        %s430 = sand.u32 %s159, 1
        %s431 = smul.addr %s430, 32
        %s432 = scalar_lea.vmem [#allocation11], %s431
        // Predicated region
        $region61: #{tpu_custom_call.1} parent=35 // pred_check
          %p433 = pneg %p169
        $region62: #{tpu_custom_call.1} parent=35 // pred_check_branch
          %435 = sbr.rel (%p433) target = $region64
        $region63: #{tpu_custom_call.1} parent=35 // pred_region
          %s437 = ssub.s32 512, 512
          %438 = vsyncadd %s429, %s437
          %s439 = smul.addr %s31, 4
          %s440 = smul.addr %s439, 128
          %s441 = scalar_lea.hbm %s4, %s440
          %s443 = sshll.u32 %s432, 4
          %s444 = int_to_ptr.vmem [resolvable:$true] %s443
          %446 = dma.vmem_to_hbm [thread:$0]  %s444, 512, %s441, %s429
        $region64: #{tpu_custom_call.1} parent=35 // pred_fallthru
          _
      $region36: #{tpu_custom_call.1} parent=5 // pred_fallthru
        _
      %p447 = scmp.le.s32.totalorder 2, %s22
      // Predicated region
      $region65: #{tpu_custom_call.1} parent=5 // pred_check
        %p448 = pneg %p447
      $region66: #{tpu_custom_call.1} parent=5 // pred_check_branch
        %450 = sbr.rel (%p448) target = $region68
      $region67: #{tpu_custom_call.1} parent=5 // pred_region
        %s451 = ssub.s32 %s22, 2
        // Predicated region
        $region69: #{tpu_custom_call.1} parent=67 // pred_check
          %p452 = pneg %p175
        $region70: #{tpu_custom_call.1} parent=67 // pred_check_branch
          %454 = sbr.rel (%p452) target = $region72
        $region71: #{tpu_custom_call.1} parent=67 // pred_region
          %s455 = sand.u32 %s160, 1
          %s456 = scalar_lea.sflag [#allocation5], %s455
          %s457 = sand.u32 %s160, 1
          %s458 = smul.addr %s457, 32
          %s459 = scalar_lea.vmem [#allocation11], %s458
          %460 = dma.done %s456, 512
        $region72: #{tpu_custom_call.1} parent=67 // pred_fallthru
          _
      $region68: #{tpu_custom_call.1} parent=5 // pred_fallthru
        _
    $region6: #{tpu_custom_call.1} parent=1 // loop_footer
      %s26 = sadd.s32 1, %s22
    $region7: #{tpu_custom_call.1} parent=1 // loop_footer_branch
      %21 = sbr.rel target = $region3
    $region8: #{tpu_custom_call.1} parent=1 // loop_exit
      _
    %461 = vsyncpa [#allocation4], 1
    %s462 = scalar_lea.sflag [#allocation4], 1
    %463 = vsyncpa %s462, 1
    %464 = vsyncpa [#allocation7], 1
    %s465 = scalar_lea.sflag [#allocation7], 1
    %466 = vsyncpa %s465, 1
    %467 = vsyncpa [#allocation10], 1
    %s468 = scalar_lea.sflag [#allocation10], 1
    %469 = vsyncpa %s468, 1
    %470 = vsyncpa [#allocation5], 1
    %s471 = scalar_lea.sflag [#allocation5], 1
    %472 = vsyncpa %s471, 1

</llo_original>
